<compile_context>
chip_gen: v7x
topology: tpu7x:2x2x1
jax: 0.10.0
libtpu: 0.0.40
codegen_flags: <defaults>
</compile_context>

<pallas_src>
import functools

import jax
import jax.numpy as jnp
import numpy as np
from jax.experimental import pallas as pl
from jax.experimental.pallas import tpu as pltpu


# ---------------------------------------------------------------------------
# Tiled matmul + bias kernel (used for input projection and the hoisted FC)
# ---------------------------------------------------------------------------

def _matmul_bias_kernel(x_ref, w_ref, b_ref, o_ref, acc_ref):
    k = pl.program_id(2)

    @pl.when(k == 0)
    def _():
        acc_ref[...] = jnp.zeros_like(acc_ref)

    acc_ref[...] += jnp.dot(x_ref[...], w_ref[...],
                            preferred_element_type=jnp.float32)

    @pl.when(k == pl.num_programs(2) - 1)
    def _():
        o_ref[...] = (acc_ref[...] + b_ref[...]).astype(o_ref.dtype)


def _tile(dim, pref):
    """Use the preferred (MXU-aligned) tile if it divides dim, else the full dim."""
    return pref if dim % pref == 0 else dim


def _matmul_bias(x, w, b, *, out_dtype):
    """(M, K) @ (K, N) + (1, N), tiled, parallel over M/N tiles, reduction over K."""
    M, K = x.shape
    _, N = w.shape
    tm = _tile(M, 128)
    tn = _tile(N, 256)    # 256-aligned N tiles for the 2x256^2 MXU on v6e/v7x
    tk = _tile(K, 256)
    grid = (M // tm, N // tn, K // tk)
    return pl.pallas_call(
        _matmul_bias_kernel,
        out_shape=jax.ShapeDtypeStruct((M, N), out_dtype),
        grid_spec=pltpu.PrefetchScalarGridSpec(
            num_scalar_prefetch=0,
            grid=grid,
            in_specs=[
                pl.BlockSpec((tm, tk), lambda i, j, k: (i, k)),
                pl.BlockSpec((tk, tn), lambda i, j, k: (k, j)),   # W streamed by tile
                pl.BlockSpec((1, tn), lambda i, j, k: (0, j)),
            ],
            out_specs=pl.BlockSpec((tm, tn), lambda i, j, k: (i, j)),
            scratch_shapes=[pltpu.VMEM((tm, tn), jnp.float32)],
        ),
        compiler_params=pltpu.CompilerParams(
            dimension_semantics=("parallel", "parallel", "arbitrary"),
            vmem_limit_bytes=32 * 1024 * 1024,
        ),
    )(x, w, b)


# ---------------------------------------------------------------------------
# Serial LSTM recurrence kernel (time-chunked; only recurrent matmuls inside)
# ---------------------------------------------------------------------------

def _lstm_recurrence_kernel(gx_ref, whh0_ref, wih1_ref, whh1_ref, b1_ref,
                            out_ref,
                            h0_ref, c0_ref, h1_ref, c1_ref,
                            *, Tc, B, H):
    @pl.when(pl.program_id(0) == 0)
    def _():
        h0_ref[...] = jnp.zeros_like(h0_ref)
        c0_ref[...] = jnp.zeros_like(c0_ref)
        h1_ref[...] = jnp.zeros_like(h1_ref)
        c1_ref[...] = jnp.zeros_like(c1_ref)

    # Hoist weight loads out of the inner time loop.
    whh0 = whh0_ref[...]
    wih1 = wih1_ref[...]
    whh1 = whh1_ref[...]
    b1 = b1_ref[...]
    bf16 = jnp.bfloat16

    def gate_act(gates, c):
        # PyTorch gate order [i | f | g | o]; at real H=512 these slices are
        # 128-lane aligned (pure VPU/EUP work, no cross-lane relayout).
        i = jax.nn.sigmoid(gates[:, 0 * H:1 * H])
        f = jax.nn.sigmoid(gates[:, 1 * H:2 * H])
        g = jnp.tanh(gates[:, 2 * H:3 * H])
        o = jax.nn.sigmoid(gates[:, 3 * H:4 * H])
        c_new = f * c + i * g
        h_new = o * jnp.tanh(c_new)
        return h_new, c_new

    def body(s, carry):
        h0, c0, h1, c1 = carry
        row = s * B
        gx = gx_ref[pl.ds(row, B), :]                     # precomputed x@W_ih0 + b0 (f32)
        g0 = gx + jnp.dot(h0.astype(bf16), whh0,
                          preferred_element_type=jnp.float32)
        h0n, c0n = gate_act(g0, c0)
        g1 = (jnp.dot(h0n.astype(bf16), wih1, preferred_element_type=jnp.float32)
              + jnp.dot(h1.astype(bf16), whh1, preferred_element_type=jnp.float32)
              + b1)
        h1n, c1n = gate_act(g1, c1)
        out_ref[pl.ds(row, B), :] = h1n.astype(out_ref.dtype)
        return (h0n, c0n, h1n, c1n)

    carry0 = (h0_ref[...], c0_ref[...], h1_ref[...], c1_ref[...])
    h0, c0, h1, c1 = jax.lax.fori_loop(0, Tc, body, carry0, unroll=True)

    # Write state back only at the chunk boundary.
    h0_ref[...] = h0
    c0_ref[...] = c0
    h1_ref[...] = h1
    c1_ref[...] = c1


def _pick_chunk(T, pref=8):
    for c in range(min(pref, T), 0, -1):
        if T % c == 0:
            return c
    return 1


def _lstm_recurrence(gates0_x, whh0, wih1, whh1, b1, *, B, H):
    TB = gates0_x.shape[0]
    T = TB // B
    Tc = _pick_chunk(T, 8)
    kernel = functools.partial(_lstm_recurrence_kernel, Tc=Tc, B=B, H=H)
    const2d = lambda t: (0, 0)
    # NOTE: the constant-index weight blocks are DMA'd once but still get default
    # double-buffers; single-buffering them (pipeline_mode=pl.Buffered(1)) would
    # halve that VMEM footprint on v7x once stable.
    return pl.pallas_call(
        kernel,
        out_shape=jax.ShapeDtypeStruct((TB, H), jnp.bfloat16),
        grid_spec=pltpu.PrefetchScalarGridSpec(
            num_scalar_prefetch=0,
            grid=(T // Tc,),
            in_specs=[
                pl.BlockSpec((Tc * B, 4 * H), lambda t: (t, 0)),   # precomputed gate inputs
                pl.BlockSpec((H, 4 * H), const2d),                 # W_hh layer 0 (bf16)
                pl.BlockSpec((H, 4 * H), const2d),                 # W_ih layer 1 (bf16)
                pl.BlockSpec((H, 4 * H), const2d),                 # W_hh layer 1 (bf16)
                pl.BlockSpec((1, 4 * H), const2d),                 # combined bias layer 1 (f32)
            ],
            out_specs=pl.BlockSpec((Tc * B, H), lambda t: (t, 0)),
            scratch_shapes=[pltpu.VMEM((B, H), jnp.float32)] * 4,  # h0, c0, h1, c1
        ),
        compiler_params=pltpu.CompilerParams(
            dimension_semantics=("arbitrary",),   # time recurrence is sequential
            vmem_limit_bytes=32 * 1024 * 1024,
        ),
    )(gates0_x, whh0, wih1, whh1, b1)


# ---------------------------------------------------------------------------
# Full forward pass
# ---------------------------------------------------------------------------

def seq2seq_lstm_forward(input_ids, params):
    """Returns logits of shape (B, T, vocab_size). Matches PyTorch forward with labels=None.

    # TODO(synk): CrossEntropyLoss(ignore_index=-100) path (labels is not None) not implemented.
    """
    bf16 = jnp.bfloat16
    emb = jnp.take(params["embedding"], input_ids, axis=0)       # (B, T, E) gather glue
    B, T, E = emb.shape
    H = params["whh0"].shape[0]
    V = params["wfc"].shape[1]

    # Time-major, lane-dense token slab (T*B, E) in bf16 for the MXU.
    x_flat = jnp.transpose(emb, (1, 0, 2)).reshape(T * B, E).astype(bf16)

    wih0 = params["wih0"].astype(bf16)
    whh0 = params["whh0"].astype(bf16)
    wih1 = params["wih1"].astype(bf16)
    whh1 = params["whh1"].astype(bf16)
    wfc = params["wfc"].astype(bf16)
    b0 = params["b0"].astype(jnp.float32)
    b1 = params["b1"].astype(jnp.float32)
    bfc = params["bfc"].astype(jnp.float32)

    # (1) Hoisted layer-0 input projection over all T*B tokens (parallel grid).
    gates0_x = _matmul_bias(x_flat, wih0, b0, out_dtype=jnp.float32)      # (T*B, 4H)

    # (2) Serial, time-chunked LSTM recurrence (only the recurrent matmuls inside).
    h1_flat = _lstm_recurrence(gates0_x, whh0, wih1, whh1, b1, B=B, H=H)  # (T*B, H) bf16

    # (3) Hoisted FC projection as one big batched matmul (vocab streamed by tile).
    logits_flat = _matmul_bias(h1_flat, wfc, bfc, out_dtype=jnp.float32)  # (T*B, V)

    return jnp.transpose(logits_flat.reshape(T, B, V), (1, 0, 2))         # (B, T, V)


# ---------------------------------------------------------------------------
# Pure-JAX reference mirroring the kernel's precision choices (bf16 weights,
# bf16 matmul operands, f32 accumulation, f32 h/c state, bf16 h1 before FC).
# ---------------------------------------------------------------------------

def _reference_forward(input_ids, params):
    bf16 = jnp.bfloat16
    f32 = jnp.float32
    emb = jnp.take(params["embedding"], input_ids, axis=0)   # (B, T, E)
    x = jnp.transpose(emb, (1, 0, 2)).astype(bf16)           # (T, B, E)
    B = x.shape[1]
    H = params["whh0"].shape[0]

    wih0 = params["wih0"].astype(bf16)
    whh0 = params["whh0"].astype(bf16)
    wih1 = params["wih1"].astype(bf16)
    whh1 = params["whh1"].astype(bf16)
    wfc = params["wfc"].astype(bf16)
    b0 = params["b0"].astype(f32)
    b1 = params["b1"].astype(f32)
    bfc = params["bfc"].astype(f32)

    def act(gates, c):
        i = jax.nn.sigmoid(gates[:, 0 * H:1 * H])
        f = jax.nn.sigmoid(gates[:, 1 * H:2 * H])
        g = jnp.tanh(gates[:, 2 * H:3 * H])
        o = jax.nn.sigmoid(gates[:, 3 * H:4 * H])
        c_new = f * c + i * g
        return o * jnp.tanh(c_new), c_new

    def step(carry, x_t):
        h0, c0, h1, c1 = carry
        g0 = (jnp.dot(x_t, wih0, preferred_element_type=f32) + b0
              + jnp.dot(h0.astype(bf16), whh0, preferred_element_type=f32))
        h0, c0 = act(g0, c0)
        g1 = (jnp.dot(h0.astype(bf16), wih1, preferred_element_type=f32)
              + jnp.dot(h1.astype(bf16), whh1, preferred_element_type=f32)
              + b1)
        h1, c1 = act(g1, c1)
        logits_t = jnp.dot(h1.astype(bf16), wfc, preferred_element_type=f32) + bfc
        return (h0, c0, h1, c1), logits_t

    z = jnp.zeros((B, H), f32)
    _, logits_tm = jax.lax.scan(step, (z, z, z, z), x)
    return jnp.transpose(logits_tm, (1, 0, 2))


# ---------------------------------------------------------------------------
# Parameter init (pre-transposed weights, pre-summed LSTM biases, PyTorch layout)
# ---------------------------------------------------------------------------

def init_params(key, vocab_size, embedding_dim, hidden_size):
    keys = jax.random.split(key, 10)
    H, E, V = hidden_size, embedding_dim, vocab_size
    s = 1.0 / np.sqrt(H)
    u = lambda k, shape: jax.random.uniform(k, shape, jnp.float32, -s, s)
    return {
        "embedding": jax.random.normal(keys[0], (V, E), jnp.float32) * 0.02,
        "wih0": u(keys[1], (E, 4 * H)),
        "whh0": u(keys[2], (H, 4 * H)),
        "b0":   u(keys[3], (1, 4 * H)) + u(keys[4], (1, 4 * H)),
        "wih1": u(keys[5], (H, 4 * H)),
        "whh1": u(keys[6], (H, 4 * H)),
        "b1":   u(keys[7], (1, 4 * H)) + u(keys[8], (1, 4 * H)),
        "wfc":  u(keys[9], (H, V)),
        "bfc":  jnp.zeros((1, V), jnp.float32),
    }


if __name__ == "__main__":
    # Small shapes consistent with the module (scaled down from 250k vocab / 256 / 512).
    VOCAB = 64
    EMB = 32
    HIDDEN = 32
    BATCH = 2
    SEQ = 8

    key = jax.random.PRNGKey(0)
    k_ids, k_params = jax.random.split(key)

    input_ids = jax.random.randint(k_ids, (BATCH, SEQ), 0, VOCAB, dtype=jnp.int32)
    params = init_params(k_params, VOCAB, EMB, HIDDEN)

    logits = jax.block_until_ready(seq2seq_lstm_forward(input_ids, params))
    assert logits.shape == (BATCH, SEQ, VOCAB), logits.shape

    ref = jax.block_until_ready(_reference_forward(input_ids, params))
    np.testing.assert_allclose(np.asarray(logits), np.asarray(ref),
                               rtol=2e-3, atol=2e-3)

    print("KERNEL_OK")
</pallas_src>

<mosaic_0001>
module attributes {stable_mosaic.version = 11 : i64} {
  func.func @_matmul_bias_kernel(%arg0: i32, %arg1: i32, %arg2: i32, %arg3: memref<16x32xbf16, #tpu.memory_space<vmem>>, %arg4: memref<32x128xbf16, #tpu.memory_space<vmem>>, %arg5: memref<1x128xf32, #tpu.memory_space<vmem>>, %arg6: memref<16x128xf32, #tpu.memory_space<vmem>>, %arg7: memref<16x128xf32, #tpu.memory_space<vmem>>) attributes {dimension_semantics = [#tpu.dimension_semantics<parallel>, #tpu.dimension_semantics<parallel>, #tpu.dimension_semantics<arbitrary>], iteration_bounds = array<i64: 1, 1, 1>, scalar_prefetch = 0 : i64, scratch_operands = 1 : i64, tpu.core_type = #tpu.core_type<tc>, window_params = [{transform_indices = @transform_0, window_bounds = array<i64: 16, 32>}, {transform_indices = @transform_1, window_bounds = array<i64: 32, 128>}, {transform_indices = @transform_2, window_bounds = array<i64: 1, 128>}, {transform_indices = @transform_3, window_bounds = array<i64: 16, 128>}]} {
    %c0_i32 = arith.constant 0 : i32
    %0 = arith.cmpi eq, %arg2, %c0_i32 : i32
    %1 = arith.extui %0 : i1 to i32
    %c0_i32_0 = arith.constant 0 : i32
    %2 = arith.cmpi ne, %1, %c0_i32_0 : i32
    scf.if %2 {
      %cst_10 = arith.constant 0.000000e+00 : f32
      %12 = vector.broadcast %cst_10 : f32 to vector<16x128xf32>
      %c0_11 = arith.constant 0 : index
      %c0_12 = arith.constant 0 : index
      %13 = vector.load %arg7[%c0_11, %c0_12] : memref<16x128xf32, #tpu.memory_space<vmem>>, vector<16x128xf32>
      tpu.vector_store %arg7[%c0_11, %c0_12], %12 {strides = array<i32>} : memref<16x128xf32, #tpu.memory_space<vmem>>, vector<16x128xf32>,
    } else {
    }
    %c0 = arith.constant 0 : index
    %c0_1 = arith.constant 0 : index
    %3 = vector.load %arg7[%c0, %c0_1] : memref<16x128xf32, #tpu.memory_space<vmem>>, vector<16x128xf32>
    %c0_2 = arith.constant 0 : index
    %c0_3 = arith.constant 0 : index
    %4 = vector.load %arg3[%c0_2, %c0_3] : memref<16x32xbf16, #tpu.memory_space<vmem>>, vector<16x32xbf16>
    %c0_4 = arith.constant 0 : index
    %c0_5 = arith.constant 0 : index
    %5 = vector.load %arg4[%c0_4, %c0_5] : memref<32x128xbf16, #tpu.memory_space<vmem>>, vector<32x128xbf16>
    %cst = arith.constant dense<0.000000e+00> : vector<16x128xf32>
    %6 = tpu.matmul %4, %5, %cst {dimension_numbers = #tpu.dot_dimension_numbers<[1], [0], [0], [1], [0, 0, 1, 1], [], []>} : vector<16x32xbf16>, vector<32x128xbf16>, vector<16x128xf32> -> vector<16x128xf32>
    %7 = arith.addf %3, %6 : vector<16x128xf32>
    %c0_6 = arith.constant 0 : index
    %c0_7 = arith.constant 0 : index
    %8 = vector.load %arg7[%c0_6, %c0_7] : memref<16x128xf32, #tpu.memory_space<vmem>>, vector<16x128xf32>
    tpu.vector_store %arg7[%c0_6, %c0_7], %7 {strides = array<i32>} : memref<16x128xf32, #tpu.memory_space<vmem>>, vector<16x128xf32>,
    %c0_i32_8 = arith.constant 0 : i32
    %9 = arith.cmpi eq, %arg2, %c0_i32_8 : i32
    %10 = arith.extui %9 : i1 to i32
    %c0_i32_9 = arith.constant 0 : i32
    %11 = arith.cmpi ne, %10, %c0_i32_9 : i32
    scf.if %11 {
      %c0_10 = arith.constant 0 : index
      %c0_11 = arith.constant 0 : index
      %12 = vector.load %arg7[%c0_10, %c0_11] : memref<16x128xf32, #tpu.memory_space<vmem>>, vector<16x128xf32>
      %c0_12 = arith.constant 0 : index
      %c0_13 = arith.constant 0 : index
      %13 = vector.load %arg5[%c0_12, %c0_13] : memref<1x128xf32, #tpu.memory_space<vmem>>, vector<1x128xf32>
      %14 = vector.broadcast %13 : vector<1x128xf32> to vector<16x128xf32>
      %15 = arith.addf %12, %14 : vector<16x128xf32>
      %c0_14 = arith.constant 0 : index
      %c0_15 = arith.constant 0 : index
      %16 = vector.load %arg6[%c0_14, %c0_15] : memref<16x128xf32, #tpu.memory_space<vmem>>, vector<16x128xf32>
      tpu.vector_store %arg6[%c0_14, %c0_15], %15 {strides = array<i32>} : memref<16x128xf32, #tpu.memory_space<vmem>>, vector<16x128xf32>,
    } else {
    }
    return
  }
  func.func @transform_0(%arg0: i32, %arg1: i32, %arg2: i32) -> (i32, i32) {
    %c0_i32 = arith.constant 0 : i32
    return %arg0, %arg2 : i32, i32
  }
  func.func @transform_1(%arg0: i32, %arg1: i32, %arg2: i32) -> (i32, i32) {
    %c0_i32 = arith.constant 0 : i32
    return %arg2, %arg1 : i32, i32
  }
  func.func @transform_2(%arg0: i32, %arg1: i32, %arg2: i32) -> (i32, i32) {
    %c0_i32 = arith.constant 0 : i32
    %c0_i32_0 = arith.constant 0 : i32
    return %c0_i32, %arg1 : i32, i32
  }
  func.func @transform_3(%arg0: i32, %arg1: i32, %arg2: i32) -> (i32, i32) {
    %c0_i32 = arith.constant 0 : i32
    return %arg0, %arg1 : i32, i32
  }
}

</mosaic_0001>

<llo_original>
// kernel: tpu_custom_call.1
$region0: #{tpu_custom_call.1}
  #allocation0 [shape = 'u32[]', space=smem, size = 0x4, offset = 0x4, fixed_abs, tag = 'smem constant byte address 0x4 - core index']
  #allocation1 [shape = 'u32[144,128]{1,0:T(1,128)}', space=vmem, size = 0x12000, scoped, tag = 'internal scratch']
  #allocation2 [shape = 'f32[16,128]{1,0:T(8,128)}', space=vmem, size = 0x2000, scoped, tag = 'scratch operand']
  %s0 = inlined_call_operand.hbm [shape: bf16[16,32], index: 0, kind: input, shape index: {}]
  %s1 = inlined_call_operand.hbm [shape: bf16[32,128], index: 1, kind: input, shape index: {}]
  %s2 = inlined_call_operand.vmem [shape: f32[1,128], index: 2, kind: input, shape index: {}]
  %s3 = inlined_call_operand.hbm [shape: f32[16,128], index: 3, kind: output, shape index: {}]
  %s4 = sld [smem:[#allocation0]]
  $region38: #{tpu_custom_call.1} parent=0
    _
  %s6 = ssub.s32 1, %s4
  %s7 = scalar_select 0, %s6, %s4
  $region1: #{tpu_custom_call.1} parent=0
    #allocation3 [shape = 'u8[4096]{0}', space=vmem, size = 0x1000, scoped, tag = 'input window, operand 0, single buffered']
    #allocation4 [shape = 's32[1]{0}', space=sflag, size = 0x4, scoped, tag = 'scoped memory for tpu_custom_call.1']
    #allocation5 [shape = 's32[1]{0}', space=sflag, size = 0x4, scoped, tag = 'scoped memory for tpu_custom_call.1']
    #allocation6 [shape = 'u8[8192]{0}', space=vmem, size = 0x2000, scoped, tag = 'input window, operand 1, single buffered']
    #allocation7 [shape = 's32[1]{0}', space=sflag, size = 0x4, scoped, tag = 'scoped memory for tpu_custom_call.1']
    #allocation8 [shape = 'u8[8192]{0}', space=vmem, size = 0x2000, scoped, tag = 'output window, operand 0, single buffered']
    %8 = vsyncpa [#allocation4], 0
    %9 = vsyncpa [#allocation7], 0
    %10 = vsyncpa [#allocation5], 0
    // Predicated region
    $region2: #{tpu_custom_call.1} parent=1 // pred_check
      _
    $region3: #{tpu_custom_call.1} parent=1 // pred_check_branch
      %12 = sbr.rel (0) target = $region5
    $region4: #{tpu_custom_call.1} parent=1 // pred_region
      %s14 = ssub.s32 128, 128
      %15 = vsyncadd [#allocation4], %s14
      %s16 = sshll.u32 [#allocation3], 4
      %s17 = int_to_ptr.vmem [resolvable:$true] %s16
      %22 = dma.hbm_to_vmem [thread:$0]  %s0, 128, %s17, [#allocation4], 64, 64, 4
    $region5: #{tpu_custom_call.1} parent=1 // pred_fallthru
      _
    // Predicated region
    $region6: #{tpu_custom_call.1} parent=1 // pred_check
      _
    $region7: #{tpu_custom_call.1} parent=1 // pred_check_branch
      %24 = sbr.rel (0) target = $region9
    $region8: #{tpu_custom_call.1} parent=1 // pred_region
      %s26 = ssub.s32 256, 256
      %27 = vsyncadd [#allocation7], %s26
      %s28 = sshll.u32 [#allocation6], 4
      %s29 = int_to_ptr.vmem [resolvable:$true] %s28
      %34 = dma.hbm_to_vmem [thread:$0]  %s1, 256, %s29, [#allocation7], 64, 64, 4
    $region9: #{tpu_custom_call.1} parent=1 // pred_fallthru
      _
    // Predicated region
    $region10: #{tpu_custom_call.1} parent=1 // pred_check
      _
    $region11: #{tpu_custom_call.1} parent=1 // pred_check_branch
      %36 = sbr.rel (0) target = $region13
    $region12: #{tpu_custom_call.1} parent=1 // pred_region
      _
    $region13: #{tpu_custom_call.1} parent=1 // pred_fallthru
      _
    // Predicated region
    $region14: #{tpu_custom_call.1} parent=1 // pred_check
      _
    $region15: #{tpu_custom_call.1} parent=1 // pred_check_branch
      %38 = sbr.rel (0) target = $region17
    $region16: #{tpu_custom_call.1} parent=1 // pred_region
      %39 = dma.done [#allocation4], 128
    $region17: #{tpu_custom_call.1} parent=1 // pred_fallthru
      _
    // Predicated region
    $region18: #{tpu_custom_call.1} parent=1 // pred_check
      _
    $region19: #{tpu_custom_call.1} parent=1 // pred_check_branch
      %41 = sbr.rel (0) target = $region21
    $region20: #{tpu_custom_call.1} parent=1 // pred_region
      %42 = dma.done [#allocation7], 256
    $region21: #{tpu_custom_call.1} parent=1 // pred_fallthru
      _
    %p44 = scmp.eq.s32.totalorder 0, 0
    // Predicated region
    $region22: #{tpu_custom_call.1} parent=1 // pred_check
      %p45 = pneg %p44
    $region23: #{tpu_custom_call.1} parent=1 // pred_check_branch
      %47 = sbr.rel (%p45) target = $region25
    $region24: #{tpu_custom_call.1} parent=1 // pred_region
      %48 = vst [vmem:[#allocation2] sm:$0xff] 0.0
      %49 = vst [vmem:[#allocation2 + $0x8] sm:$0xff] 0.0
    $region25: #{tpu_custom_call.1} parent=1 // pred_fallthru
      _
    %v50 = vld [vmem:[#allocation2] sm:$0xff]
    %v51 = vld [vmem:[#allocation2 + $0x8] sm:$0xff]
    %v52 = vld [vmem:[#allocation3] sm:$0xf]
    %v53 = vld [vmem:[#allocation3 + $0x4] sm:$0xf]
    %v54 = vld [vmem:[#allocation6] sm:$0xf]
    %v55 = vld [vmem:[#allocation6 + $0x4] sm:$0xf]
    %v56 = vld [vmem:[#allocation6 + $0x8] sm:$0xf]
    %v57 = vld [vmem:[#allocation6 + $0xc] sm:$0xf]
    %v60 = vunpack.c.l.b16 %v52
    %v61 = vunpack.c.l.b16 %v53
    %v62 = vpack.c.b16 %v61, %v60
    %v67 = vunpack.c.l.b16 %v54
    %v68 = vunpack.c.l.b16 %v55
    %v69 = vunpack.c.l.b16 %v56
    %v70 = vunpack.c.l.b16 %v57
    %v71 = vpack.c.b16 %v68, %v67
    %v72 = vpack.c.b16 %v70, %v69
    %vm75 = vcmask 261120
    %v77 = vsel %vm75, %v62, 0
    %79 = vmatprep.subr.bf16.mxu0 0
    %80 = vmatpush1.bf16.msra.mxu0 %v71
    %81 = vmatprep.subr.bf16.mxu0 0
    %82 = vmatpush1.bf16.msra.mxu0 %v72
    %83 = vmatprep.subr.bf16.mxu0 0
    %84 = vmatpush1.bf16.msra.mxu0 0
    %85 = vmatprep.subr.bf16.mxu0 0
    %86 = vmatpush1.bf16.msra.mxu0 0
    %87 = vmatprep.subr.bf16.mxu0 0
    %88 = vmatpush1.bf16.msra.mxu0 0
    %89 = vmatprep.subr.bf16.mxu0 0
    %90 = vmatpush1.bf16.msra.mxu0 0
    %91 = vmatprep.subr.bf16.mxu0 0
    %92 = vmatpush1.bf16.msra.mxu0 0
    %93 = vmatprep.subr.bf16.mxu0 0
    %94 = vmatpush1.bf16.msra.mxu0 0
    %95 = vmatprep.subr.bf16.mxu0 0
    %96 = vmatpush1.bf16.msra.mxu0 0
    %97 = vmatprep.subr.bf16.mxu0 0
    %98 = vmatpush1.bf16.msra.mxu0 0
    %99 = vmatprep.subr.bf16.mxu0 0
    %100 = vmatpush1.bf16.msra.mxu0 0
    %101 = vmatprep.subr.bf16.mxu0 0
    %102 = vmatpush1.bf16.msra.mxu0 0
    %103 = vmatprep.subr.bf16.mxu0 0
    %104 = vmatpush1.bf16.msra.mxu0 0
    %105 = vmatprep.subr.bf16.mxu0 0
    %106 = vmatpush1.bf16.msra.mxu0 0
    %107 = vmatprep.subr.bf16.mxu0 0
    %108 = vmatpush1.bf16.msra.mxu0 0
    %109 = vmatprep.subr.bf16.mxu0 0
    %110 = vmatpush1.bf16.msra.mxu0 0
    %111 = vmatprep.mubr.bf16.mxu0 0
    %112 = vmatmul.mubr.bf16.gmra.mrb[0].mxu0 %v77
    %v113 = vpop.f32.mrb[0].mxu0
    %v114 = vadd.f32 0.0, %v113
    %v115 = vpop.f32.mrb[0].mxu0
    %v116 = vpop.f32.mrb[0].mxu0
    %v117 = vadd.f32 0.0, %v116
    %v118 = vpop.f32.mrb[0].mxu0
    %119 = vdwg.mxu0
    %v120 = vadd.f32 %v50, %v114
    %v121 = vadd.f32 %v51, %v117
    %122 = vst [vmem:[#allocation2] sm:$0xff] %v120
    %123 = vst [vmem:[#allocation2 + $0x8] sm:$0xff] %v121
    // Predicated region
    $region26: #{tpu_custom_call.1} parent=1 // pred_check
      %p124 = pneg %p44
    $region27: #{tpu_custom_call.1} parent=1 // pred_check_branch
      %126 = sbr.rel (%p124) target = $region29
    $region28: #{tpu_custom_call.1} parent=1 // pred_region
      %v127 = vld [vmem:[#allocation2] sm:$0xff]
      %v128 = vld [vmem:[#allocation2 + $0x8] sm:$0xff]
      %v129 = vld [vmem:[%s2] sm:$0x1]
      %v131 = vlaneseq
      %v132 = vshrl.u32 %v131, 7
      %v133 = vsub.s32 0, %v132
      %v134 = vrot.slane %v129, %v133
      %v136 = vadd.f32 %v127, %v134
      %v137 = vadd.f32 %v128, %v134
      %138 = vst [vmem:[#allocation8] sm:$0xff] %v136
      %139 = vst [vmem:[#allocation8 + $0x8] sm:$0xff] %v137
    $region29: #{tpu_custom_call.1} parent=1 // pred_fallthru
      _
    // Predicated region
    $region30: #{tpu_custom_call.1} parent=1 // pred_check
      _
    $region31: #{tpu_custom_call.1} parent=1 // pred_check_branch
      %141 = sbr.rel (0) target = $region33
    $region32: #{tpu_custom_call.1} parent=1 // pred_region
      %s143 = ssub.s32 256, 256
      %144 = vsyncadd [#allocation5], %s143
      %s145 = sshll.u32 [#allocation8], 4
      %s146 = int_to_ptr.vmem [resolvable:$true] %s145
      %151 = dma.vmem_to_hbm [thread:$0]  %s146, 256, %s3, [#allocation5], 128, 128, 8
    $region33: #{tpu_custom_call.1} parent=1 // pred_fallthru
      _
    // Predicated region
    $region34: #{tpu_custom_call.1} parent=1 // pred_check
      _
    $region35: #{tpu_custom_call.1} parent=1 // pred_check_branch
      %153 = sbr.rel (0) target = $region37
    $region36: #{tpu_custom_call.1} parent=1 // pred_region
      %154 = dma.done [#allocation5], 256
    $region37: #{tpu_custom_call.1} parent=1 // pred_fallthru
      _
    %155 = vsyncpa [#allocation4], 1
    %156 = vsyncpa [#allocation7], 1
    %157 = vsyncpa [#allocation5], 1

</llo_original>
